<compile_context>
chip_gen: v6e
topology: v6e:2x2x1
jax: 0.10.0
libtpu: 0.0.40
codegen_flags: <defaults>
</compile_context>

<pallas_src>
import functools

import jax
import jax.numpy as jnp
from jax.experimental import pallas as pl
from jax.experimental.pallas import tpu as pltpu

LANE = 128  # lane width; hidden dims and (action_dim + 1) are padded to this


def _round_up(n, m):
    return ((n + m - 1) // m) * m


def policy_kernel(x_ref, w1_ref, wrest_ref, b_ref, logits_ref, value_ref, *,
                  action_dim):
    # Layer 1: (TB, S)bf16 @ (S, 128)bf16 -> (TB, 128)f32; lanes >= H1 stay 0.
    h = jnp.dot(x_ref[...], w1_ref[...], preferred_element_type=jnp.float32)
    h = jnp.maximum(h + b_ref[0:1, :], 0.0)
    # Layer 2: (TB, 128) @ (128, 128); padded rows/lanes are zero.
    h = jnp.dot(h.astype(jnp.bfloat16), wrest_ref[0],
                preferred_element_type=jnp.float32)
    h = jnp.maximum(h + b_ref[1:2, :], 0.0)
    # Fused heads: lanes 0:A = action logits, lane A = value, rest zero.
    y = jnp.dot(h.astype(jnp.bfloat16), wrest_ref[1],
                preferred_element_type=jnp.float32) + b_ref[2:3, :]
    # Two narrow stores (masked vst) instead of one 128-lane padded slab:
    # total writeback is (A+1)*4 bytes/row instead of 512 bytes/row.
    logits_ref[...] = y[:, :action_dim]
    value_ref[...] = y[:, action_dim:action_dim + 1]


def init_params(key, state_dim, action_dim, hidden_dims=(64, 64)):
    """PyTorch-style uniform fan-in init; weights stored as (in, out)."""
    dims = [state_dim] + list(hidden_dims)
    keys = jax.random.split(key, 8)
    params = {}

    def linear(kw, kb, fan_in, fan_out):
        bound = 1.0 / jnp.sqrt(fan_in)
        w = jax.random.uniform(kw, (fan_in, fan_out), jnp.float32, -bound, bound)
        b = jax.random.uniform(kb, (1, fan_out), jnp.float32, -bound, bound)
        return w, b

    params["w1"], params["b1"] = linear(keys[0], keys[1], dims[0], dims[1])
    params["w2"], params["b2"] = linear(keys[2], keys[3], dims[1], dims[2])
    params["wa"], params["ba"] = linear(keys[4], keys[5], dims[2], action_dim)
    params["wv"], params["bv"] = linear(keys[6], keys[7], dims[2], 1)
    return params


def pack_params(params):
    """Pack 8 raw tensors into 3 lane-aligned operands (do this once).

    Weights are cast to bf16 (MXU-native, halves DMA/residency); biases stay
    f32 and are added to the f32 MXU accumulators.
    """
    w1, b1 = params["w1"], params["b1"]
    w2, b2 = params["w2"], params["b2"]
    wa, ba = params["wa"], params["ba"]
    wv, bv = params["wv"], params["bv"]
    S, H1 = w1.shape
    H2 = w2.shape[1]
    A = wa.shape[1]
    assert H1 <= LANE and H2 <= LANE and (A + 1) <= LANE, \
        "packing assumes hidden dims and action_dim+1 fit in one lane group"

    def pad_lanes(m):
        return jnp.pad(m, ((0, 0), (0, LANE - m.shape[1])))

    # Layer 1 weight: (S, 128) bf16, lanes >= H1 zero.
    w1p = pad_lanes(w1).astype(jnp.bfloat16)
    # Layer 2 weight: (128, 128), rows >= H1 / lanes >= H2 zero.
    w2p = jnp.pad(w2, ((0, LANE - H1), (0, LANE - H2)))
    # Fused head weight: [wa | wv] -> (128, 128), rows >= H2 / lanes >= A+1 zero.
    wh = jnp.concatenate([wa, wv], axis=1)
    whp = jnp.pad(wh, ((0, LANE - H2), (0, LANE - (A + 1))))
    wrest = jnp.stack([w2p, whp], axis=0).astype(jnp.bfloat16)   # (2, 128, 128)

    # Bias slab (f32): rows 0/1/2 = b1 / b2 / [ba | bv], padded to (8, 128).
    bh = jnp.concatenate([ba, bv], axis=1)
    bpack = jnp.concatenate(
        [pad_lanes(b1), pad_lanes(b2), pad_lanes(bh)], axis=0)   # (3, 128)
    bpack = jnp.pad(bpack, ((0, 8 - bpack.shape[0]), (0, 0)))    # (8, 128)
    bpack = bpack.astype(jnp.float32)

    return {"w1": w1p, "wrest": wrest, "b": bpack,
            "state_dim": S, "action_dim": A, "h1": H1, "h2": H2}


def policy_network_forward(x, packed, *, tb=None):
    """Fused forward pass. x: (B, state_dim) -> (logits (B, A), value (B, 1))."""
    B, S = x.shape
    assert S == packed["state_dim"]
    A = packed["action_dim"]

    # ---- batch tiling -------------------------------------------------------
    rows = _round_up(B, 8)
    if tb is None:
        # Large default tile: kernel is per-step-overhead / HBM bound, not
        # VMEM bound (resident weights ~80 KB, x+out tiles at tb=512 ~50 KB).
        tb = 512
    tb = max(8, (tb // 8) * 8)
    if rows >= 16:
        # Guarantee >= 2 grid steps so the "parallel" batch axis can actually
        # be sharded across both TensorCores on v7x.
        tb = min(tb, _round_up(-(-rows // 2), 8))
    tb = min(tb, rows)
    b_pad = _round_up(B, tb)

    x = x.astype(jnp.bfloat16)
    if b_pad != B:
        x = jnp.pad(x, ((0, b_pad - B), (0, 0)))
    grid = (b_pad // tb,)

    flops = 2 * b_pad * (S * packed["h1"] + packed["h1"] * packed["h2"]
                         + packed["h2"] * (A + 1))
    bytes_accessed = (x.size * 2 + packed["w1"].size * 2
                      + packed["wrest"].size * 2 + packed["b"].size * 4
                      + b_pad * (A + 1) * 4)

    kernel = functools.partial(policy_kernel, action_dim=A)
    logits, value = pl.pallas_call(
        kernel,
        out_shape=(jax.ShapeDtypeStruct((b_pad, A), jnp.float32),
                   jax.ShapeDtypeStruct((b_pad, 1), jnp.float32)),
        grid=grid,
        in_specs=[
            pl.BlockSpec((tb, S), lambda i: (i, 0)),             # x: batch-tiled
            pl.BlockSpec((S, LANE), lambda i: (0, 0)),           # w1: resident
            pl.BlockSpec((2, LANE, LANE), lambda i: (0, 0, 0)),  # w2 + fused head
            pl.BlockSpec((8, LANE), lambda i: (0, 0)),           # bias slab
        ],
        out_specs=(pl.BlockSpec((tb, A), lambda i: (i, 0)),      # logits
                   pl.BlockSpec((tb, 1), lambda i: (i, 0))),     # value
        compiler_params=pltpu.CompilerParams(
            dimension_semantics=("parallel",)),
        cost_estimate=pl.CostEstimate(
            flops=flops, transcendentals=0, bytes_accessed=bytes_accessed),
    )(x, packed["w1"], packed["wrest"], packed["b"])

    if b_pad != B:
        logits = logits[:B]
        value = value[:B]
    return logits, value


def _reference_forward(x, params):
    h = jnp.maximum(x @ params["w1"] + params["b1"], 0.0)
    h = jnp.maximum(h @ params["w2"] + params["b2"], 0.0)
    return h @ params["wa"] + params["ba"], h @ params["wv"] + params["bv"]


if __name__ == "__main__":
    batch = 8
    state_dim = 16
    action_dim = 4
    hidden_dims = (64, 64)

    key = jax.random.PRNGKey(0)
    k_x, k_p, k_x2, k_x3 = jax.random.split(key, 4)

    params = init_params(k_p, state_dim, action_dim, hidden_dims)
    packed = pack_params(params)

    # bf16 weights/activations (f32 accumulation): loosen tolerance vs f32 ref.
    TOL = dict(atol=5e-2, rtol=5e-2)

    x = jax.random.normal(k_x, (batch, state_dim), dtype=jnp.float32)
    action_logits, value = policy_network_forward(x, packed)
    jax.block_until_ready((action_logits, value))

    ref_act, ref_val = _reference_forward(x, params)
    assert action_logits.shape == (batch, action_dim)
    assert value.shape == (batch, 1)
    assert jnp.allclose(action_logits, ref_act, **TOL)
    assert jnp.allclose(value, ref_val, **TOL)

    # Batch-padding path (B not a multiple of 8).
    x2 = jax.random.normal(k_x2, (5, state_dim), dtype=jnp.float32)
    a2, v2 = policy_network_forward(x2, packed)
    jax.block_until_ready((a2, v2))
    r_a2, r_v2 = _reference_forward(x2, params)
    assert a2.shape == (5, action_dim) and v2.shape == (5, 1)
    assert jnp.allclose(a2, r_a2, **TOL)
    assert jnp.allclose(v2, r_v2, **TOL)

    # Multi-grid-step path (>= 2 steps so both v7x TensorCores get work).
    x3 = jax.random.normal(k_x3, (48, state_dim), dtype=jnp.float32)
    a3, v3 = policy_network_forward(x3, packed)
    jax.block_until_ready((a3, v3))
    r_a3, r_v3 = _reference_forward(x3, params)
    assert a3.shape == (48, action_dim) and v3.shape == (48, 1)
    assert jnp.allclose(a3, r_a3, **TOL)
    assert jnp.allclose(v3, r_v3, **TOL)

    print("KERNEL_OK")
</pallas_src>

<mosaic_0001>
module attributes {stable_mosaic.version = 11 : i64} {
  func.func @policy_kernel(%arg0: i32, %arg1: memref<8x16xbf16, #tpu.memory_space<vmem>>, %arg2: memref<16x128xbf16, #tpu.memory_space<vmem>>, %arg3: memref<2x128x128xbf16, #tpu.memory_space<vmem>>, %arg4: memref<8x128xf32, #tpu.memory_space<vmem>>, %arg5: memref<8x4xf32, #tpu.memory_space<vmem>>, %arg6: memref<8x1xf32, #tpu.memory_space<vmem>>) attributes {dimension_semantics = [#tpu.dimension_semantics<parallel>], iteration_bounds = array<i64: 1>, scalar_prefetch = 0 : i64, scratch_operands = 0 : i64, tpu.core_type = #tpu.core_type<tc>, window_params = [{transform_indices = @transform_0, window_bounds = array<i64: 8, 16>}, {pipeline_mode = #tpu.pipeline_mode<synchronous>, transform_indices = @transform_1, window_bounds = array<i64: 16, 128>}, {pipeline_mode = #tpu.pipeline_mode<synchronous>, transform_indices = @transform_2, window_bounds = array<i64: 2, 128, 128>}, {pipeline_mode = #tpu.pipeline_mode<synchronous>, transform_indices = @transform_3, window_bounds = array<i64: 8, 128>}, {transform_indices = @transform_4, window_bounds = array<i64: 8, 4>}, {transform_indices = @transform_5, window_bounds = array<i64: 8, 1>}]} {
    %c0 = arith.constant 0 : index
    %c0_0 = arith.constant 0 : index
    %0 = vector.load %arg1[%c0, %c0_0] : memref<8x16xbf16, #tpu.memory_space<vmem>>, vector<8x16xbf16>
    %c0_1 = arith.constant 0 : index
    %c0_2 = arith.constant 0 : index
    %1 = vector.load %arg2[%c0_1, %c0_2] : memref<16x128xbf16, #tpu.memory_space<vmem>>, vector<16x128xbf16>
    %cst = arith.constant dense<0.000000e+00> : vector<8x128xf32>
    %2 = tpu.matmul %0, %1, %cst {dimension_numbers = #tpu.dot_dimension_numbers<[1], [0], [0], [1], [0, 0, 1, 1], [], []>} : vector<8x16xbf16>, vector<16x128xbf16>, vector<8x128xf32> -> vector<8x128xf32>
    %c0_3 = arith.constant 0 : index
    %c0_4 = arith.constant 0 : index
    %3 = vector.load %arg4[%c0_3, %c0_4] : memref<8x128xf32, #tpu.memory_space<vmem>>, vector<1x128xf32>
    %4 = vector.broadcast %3 : vector<1x128xf32> to vector<8x128xf32>
    %5 = arith.addf %2, %4 : vector<8x128xf32>
    %cst_5 = arith.constant 0.000000e+00 : f32
    %6 = vector.broadcast %cst_5 : f32 to vector<8x128xf32>
    %7 = arith.maximumf %5, %6 : vector<8x128xf32>
    %8 = arith.truncf %7 : vector<8x128xf32> to vector<8x128xbf16>
    %c0_6 = arith.constant 0 : index
    %c0_7 = arith.constant 0 : index
    %c0_8 = arith.constant 0 : index
    %9 = vector.load %arg3[%c0_6, %c0_7, %c0_8] : memref<2x128x128xbf16, #tpu.memory_space<vmem>>, vector<1x128x128xbf16>
    %10 = vector.shape_cast %9 : vector<1x128x128xbf16> to vector<128x128xbf16>
    %cst_9 = arith.constant dense<0.000000e+00> : vector<8x128xf32>
    %11 = tpu.matmul %8, %10, %cst_9 {dimension_numbers = #tpu.dot_dimension_numbers<[1], [0], [0], [1], [0, 0, 1, 1], [], []>} : vector<8x128xbf16>, vector<128x128xbf16>, vector<8x128xf32> -> vector<8x128xf32>
    %c1 = arith.constant 1 : index
    %c0_10 = arith.constant 0 : index
    %12 = vector.load %arg4[%c1, %c0_10] : memref<8x128xf32, #tpu.memory_space<vmem>>, vector<1x128xf32>
    %13 = vector.broadcast %12 : vector<1x128xf32> to vector<8x128xf32>
    %14 = arith.addf %11, %13 : vector<8x128xf32>
    %cst_11 = arith.constant 0.000000e+00 : f32
    %15 = vector.broadcast %cst_11 : f32 to vector<8x128xf32>
    %16 = arith.maximumf %14, %15 : vector<8x128xf32>
    %17 = arith.truncf %16 : vector<8x128xf32> to vector<8x128xbf16>
    %c1_12 = arith.constant 1 : index
    %c0_13 = arith.constant 0 : index
    %c0_14 = arith.constant 0 : index
    %18 = vector.load %arg3[%c1_12, %c0_13, %c0_14] : memref<2x128x128xbf16, #tpu.memory_space<vmem>>, vector<1x128x128xbf16>
    %19 = vector.shape_cast %18 : vector<1x128x128xbf16> to vector<128x128xbf16>
    %cst_15 = arith.constant dense<0.000000e+00> : vector<8x128xf32>
    %20 = tpu.matmul %17, %19, %cst_15 {dimension_numbers = #tpu.dot_dimension_numbers<[1], [0], [0], [1], [0, 0, 1, 1], [], []>} : vector<8x128xbf16>, vector<128x128xbf16>, vector<8x128xf32> -> vector<8x128xf32>
    %c2 = arith.constant 2 : index
    %c0_16 = arith.constant 0 : index
    %21 = vector.load %arg4[%c2, %c0_16] : memref<8x128xf32, #tpu.memory_space<vmem>>, vector<1x128xf32>
    %22 = vector.broadcast %21 : vector<1x128xf32> to vector<8x128xf32>
    %23 = arith.addf %20, %22 : vector<8x128xf32>
    %24 = vector.extract_strided_slice %23 {offsets = [0, 0], sizes = [8, 4], strides = [1, 1]} : vector<8x128xf32> to vector<8x4xf32>
    %c0_17 = arith.constant 0 : index
    %c0_18 = arith.constant 0 : index
    %25 = vector.load %arg5[%c0_17, %c0_18] : memref<8x4xf32, #tpu.memory_space<vmem>>, vector<8x4xf32>
    tpu.vector_store %arg5[%c0_17, %c0_18], %24 {strides = array<i32>} : memref<8x4xf32, #tpu.memory_space<vmem>>, vector<8x4xf32>,
    %26 = vector.extract_strided_slice %23 {offsets = [0, 4], sizes = [8, 1], strides = [1, 1]} : vector<8x128xf32> to vector<8x1xf32>
    %c0_19 = arith.constant 0 : index
    %c0_20 = arith.constant 0 : index
    %27 = vector.load %arg6[%c0_19, %c0_20] : memref<8x1xf32, #tpu.memory_space<vmem>>, vector<8x1xf32>
    tpu.vector_store %arg6[%c0_19, %c0_20], %26 {strides = array<i32>} : memref<8x1xf32, #tpu.memory_space<vmem>>, vector<8x1xf32>,
    return
  }
  func.func @transform_0(%arg0: i32) -> (i32, i32) {
    %c0_i32 = arith.constant 0 : i32
    %c0_i32_0 = arith.constant 0 : i32
    return %arg0, %c0_i32 : i32, i32
  }
  func.func @transform_1(%arg0: i32) -> (i32, i32) {
    %c0_i32 = arith.constant 0 : i32
    %c0_i32_0 = arith.constant 0 : i32
    %c0_i32_1 = arith.constant 0 : i32
    return %c0_i32, %c0_i32_0 : i32, i32
  }
  func.func @transform_2(%arg0: i32) -> (i32, i32, i32) {
    %c0_i32 = arith.constant 0 : i32
    %c0_i32_0 = arith.constant 0 : i32
    %c0_i32_1 = arith.constant 0 : i32
    %c0_i32_2 = arith.constant 0 : i32
    return %c0_i32, %c0_i32_0, %c0_i32_1 : i32, i32, i32
  }
  func.func @transform_3(%arg0: i32) -> (i32, i32) {
    %c0_i32 = arith.constant 0 : i32
    %c0_i32_0 = arith.constant 0 : i32
    %c0_i32_1 = arith.constant 0 : i32
    return %c0_i32, %c0_i32_0 : i32, i32
  }
  func.func @transform_4(%arg0: i32) -> (i32, i32) {
    %c0_i32 = arith.constant 0 : i32
    %c0_i32_0 = arith.constant 0 : i32
    return %arg0, %c0_i32 : i32, i32
  }
  func.func @transform_5(%arg0: i32) -> (i32, i32) {
    %c0_i32 = arith.constant 0 : i32
    %c0_i32_0 = arith.constant 0 : i32
    return %arg0, %c0_i32 : i32, i32
  }
}

</mosaic_0001>

<llo_original>
// kernel: tpu_custom_call.1
$region0: #{tpu_custom_call.1}
  #allocation0 [shape = 'u32[]', space=smem, size = 0x4, offset = 0x4, fixed_abs, tag = 'smem constant byte address 0x4 - core index']
  #allocation1 [shape = 'u32[144,128]{1,0:T(1,128)}', space=vmem, size = 0x12000, scoped, tag = 'internal scratch']
  %s0 = inlined_call_operand.hbm [shape: bf16[8,16], index: 0, kind: input, shape index: {}]
  %s1 = inlined_call_operand.hbm [shape: bf16[16,128], index: 1, kind: input, shape index: {}]
  %s2 = inlined_call_operand.hbm [shape: bf16[2,128,128], index: 2, kind: input, shape index: {}]
  %s3 = inlined_call_operand.hbm [shape: f32[8,128], index: 3, kind: input, shape index: {}]
  %s4 = inlined_call_operand.vmem [shape: f32[8,4], index: 4, kind: output, shape index: {0}]
  %s5 = inlined_call_operand.vmem [shape: f32[8,1], index: 5, kind: output, shape index: {1}]
  %6 = xla_tuple %s4, %s5
  %s7 = sld [smem:[#allocation0]]
  $region50: #{tpu_custom_call.1} parent=0
    _
  %s9 = ssub.s32 1, %s7
  %s10 = scalar_select 0, %s9, %s7
  $region1: #{tpu_custom_call.1} parent=0
    #allocation2 [shape = 'u8[2048]{0}', space=vmem, size = 0x800, scoped, tag = 'input window, operand 0, single buffered']
    #allocation3 [shape = 's32[1]{0}', space=sflag, size = 0x4, scoped, tag = 'scoped memory for tpu_custom_call.1']
    #allocation4 [shape = 'u8[4096]{0}', space=vmem, size = 0x1000, scoped, tag = 'input window, operand 1, single buffered']
    #allocation5 [shape = 's32[1]{0}', space=sflag, size = 0x4, scoped, tag = 'scoped memory for tpu_custom_call.1']
    #allocation6 [shape = 'u8[65536]{0}', space=vmem, size = 0x10000, scoped, tag = 'input window, operand 2, single buffered']
    #allocation7 [shape = 'u8[4096]{0}', space=vmem, size = 0x1000, scoped, tag = 'input window, operand 3, single buffered']
    #allocation8 [shape = 's32[1]{0}', space=sflag, size = 0x4, scoped, tag = 'scoped memory for tpu_custom_call.1']
    %11 = vsyncpa [#allocation3], 0
    %12 = vsyncpa [#allocation5], 0
    %13 = vsyncpa [#allocation8], 0
    // Predicated region
    $region2: #{tpu_custom_call.1} parent=1 // pred_check
      _
    $region3: #{tpu_custom_call.1} parent=1 // pred_check_branch
      %15 = sbr.rel (0) target = $region5
    $region4: #{tpu_custom_call.1} parent=1 // pred_region
      %s17 = ssub.s32 64, 64
      %18 = vsyncadd [#allocation3], %s17
      %s20 = sshll.u32 [#allocation2], 4
      %s21 = int_to_ptr.vmem [resolvable:$true] %s20
      %23 = dma.hbm_to_vmem [thread:$0]  %s0, 64, %s21, [#allocation3]
    $region5: #{tpu_custom_call.1} parent=1 // pred_fallthru
      _
    // Predicated region
    $region6: #{tpu_custom_call.1} parent=1 // pred_check
      _
    $region7: #{tpu_custom_call.1} parent=1 // pred_check_branch
      %25 = sbr.rel (0) target = $region9
    $region8: #{tpu_custom_call.1} parent=1 // pred_region
      %s27 = ssub.s32 128, 128
      %28 = vsyncadd [#allocation5], %s27
      %s29 = sshll.u32 [#allocation4], 4
      %s30 = int_to_ptr.vmem [resolvable:$true] %s29
      %35 = dma.hbm_to_vmem [thread:$0]  %s1, 128, %s30, [#allocation5], 64, 64, 4
    $region9: #{tpu_custom_call.1} parent=1 // pred_fallthru
      _
    // Predicated region
    $region10: #{tpu_custom_call.1} parent=1 // pred_check
      _
    $region11: #{tpu_custom_call.1} parent=1 // pred_check_branch
      %37 = sbr.rel (0) target = $region13
    $region12: #{tpu_custom_call.1} parent=1 // pred_region
      %s39 = ssub.s32 2048, 2048
      %40 = vsyncadd [#allocation5], %s39
      %s41 = sshll.u32 [#allocation6], 4
      %s42 = int_to_ptr.vmem [resolvable:$true] %s41
      %47 = dma.hbm_to_vmem [thread:$0]  %s2, 2048, %s42, [#allocation5], 64, 64, 4
    $region13: #{tpu_custom_call.1} parent=1 // pred_fallthru
      _
    // Predicated region
    $region14: #{tpu_custom_call.1} parent=1 // pred_check
      _
    $region15: #{tpu_custom_call.1} parent=1 // pred_check_branch
      %49 = sbr.rel (0) target = $region17
    $region16: #{tpu_custom_call.1} parent=1 // pred_region
      %s51 = ssub.s32 128, 128
      %52 = vsyncadd [#allocation8], %s51
      %s54 = sshll.u32 [#allocation7], 4
      %s55 = int_to_ptr.vmem [resolvable:$true] %s54
      %57 = dma.hbm_to_vmem [thread:$0]  %s3, 128, %s55, [#allocation8]
    $region17: #{tpu_custom_call.1} parent=1 // pred_fallthru
      _
    // Predicated region
    $region18: #{tpu_custom_call.1} parent=1 // pred_check
      _
    $region19: #{tpu_custom_call.1} parent=1 // pred_check_branch
      %59 = sbr.rel (0) target = $region21
    $region20: #{tpu_custom_call.1} parent=1 // pred_region
      %60 = dma.done [#allocation3], 64
    $region21: #{tpu_custom_call.1} parent=1 // pred_fallthru
      _
    // Predicated region
    $region22: #{tpu_custom_call.1} parent=1 // pred_check
      _
    $region23: #{tpu_custom_call.1} parent=1 // pred_check_branch
      %62 = sbr.rel (0) target = $region25
    $region24: #{tpu_custom_call.1} parent=1 // pred_region
      %63 = dma.done [#allocation5], 128
    $region25: #{tpu_custom_call.1} parent=1 // pred_fallthru
      _
    // Predicated region
    $region26: #{tpu_custom_call.1} parent=1 // pred_check
      _
    $region27: #{tpu_custom_call.1} parent=1 // pred_check_branch
      %65 = sbr.rel (0) target = $region29
    $region28: #{tpu_custom_call.1} parent=1 // pred_region
      %66 = dma.done [#allocation5], 2048
    $region29: #{tpu_custom_call.1} parent=1 // pred_fallthru
      _
    // Predicated region
    $region30: #{tpu_custom_call.1} parent=1 // pred_check
      _
    $region31: #{tpu_custom_call.1} parent=1 // pred_check_branch
      %68 = sbr.rel (0) target = $region33
    $region32: #{tpu_custom_call.1} parent=1 // pred_region
      %69 = dma.done [#allocation8], 128
    $region33: #{tpu_custom_call.1} parent=1 // pred_fallthru
      _
    %v71 = vld [vmem:[#allocation2] sm:$0xf]
    %v72 = vld [vmem:[#allocation4] sm:$0xf]
    %v73 = vld [vmem:[#allocation4 + $0x4] sm:$0xf]
    %v74 = vld [vmem:[#allocation7] sm:$0x1]
    %v75 = vlaneseq
    %v76 = vshrl.u32 %v75, 7
    %v77 = vsub.s32 0, %v76
    %v78 = vrot.slane %v74, %v77
    %v81 = vunpack.c.l.b16 %v72
    %v82 = vunpack.c.l.b16 %v73
    %v83 = vpack.c.b16 %v82, %v81
    %vm85 = vcmask 130048
    %v87 = vsel %vm85, %v71, 0
    %89 = vmatprep.subr.bf16.mxu0 0
    %90 = vmatpush1.bf16.msra.mxu0 0
    %91 = vmatprep.subr.bf16.mxu0 0
    %92 = vmatpush1.bf16.msra.mxu0 0
    %93 = vmatprep.subr.bf16.mxu0 0
    %94 = vmatpush1.bf16.msra.mxu0 0
    %95 = vmatprep.subr.bf16.mxu0 0
    %96 = vmatpush1.bf16.msra.mxu0 0
    %97 = vmatprep.subr.bf16.mxu0 0
    %98 = vmatpush1.bf16.msra.mxu0 0
    %99 = vmatprep.subr.bf16.mxu0 0
    %100 = vmatpush1.bf16.msra.mxu0 0
    %101 = vmatprep.subr.bf16.mxu0 0
    %102 = vmatpush1.bf16.msra.mxu0 0
    %103 = vmatprep.subr.bf16.mxu0 0
    %104 = vmatpush1.bf16.msra.mxu0 %v83
    %105 = vmatprep.subr.bf16.mxu0 0
    %106 = vmatpush2.bf16.msra.mxu0 0
    %107 = vmatprep.subr.bf16.mxu0 0
    %108 = vmatpush2.bf16.msra.mxu0 0
    %109 = vmatprep.subr.bf16.mxu0 0
    %110 = vmatpush2.bf16.msra.mxu0 0
    %111 = vmatprep.subr.bf16.mxu0 0
    %112 = vmatpush2.bf16.msra.mxu0 0
    %113 = vmatprep.subr.bf16.mxu0 0
    %114 = vmatpush2.bf16.msra.mxu0 0
    %115 = vmatprep.subr.bf16.mxu0 0
    %116 = vmatpush2.bf16.msra.mxu0 0
    %117 = vmatprep.subr.bf16.mxu0 0
    %118 = vmatpush2.bf16.msra.mxu0 0
    %119 = vmatprep.subr.bf16.mxu0 0
    %120 = vmatpush2.bf16.msra.mxu0 0
    %121 = vmatprep.mubr.bf16.mxu0 0
    %122 = vmatmul.mubr.bf16.gmra.mxu0 %v87
    %v123 = vpop.f32.mrf.mxu0
    %v124 = vadd.f32 %v78, %v123
    %v125 = vpop.f32.mrf.mxu0
    %v126 = vpop.f32.mrf.mxu0
    %v127 = vpop.f32.mrf.mxu0
    %128 = vdwg.mxu0
    %v129 = vmax.f32 %v124, 0.0
    %v130 = vpack.c.bf16 %v129, %v129
    %v131 = vld [vmem:[#allocation6] sm:$0xf]
    %v132 = vld [vmem:[#allocation6 + $0x4] sm:$0xf]
    %v133 = vld [vmem:[#allocation6 + $0x8] sm:$0xf]
    %v134 = vld [vmem:[#allocation6 + $0xc] sm:$0xf]
    %v135 = vld [vmem:[#allocation6 + $0x10] sm:$0xf]
    %v136 = vld [vmem:[#allocation6 + $0x14] sm:$0xf]
    %v137 = vld [vmem:[#allocation6 + $0x18] sm:$0xf]
    %v138 = vld [vmem:[#allocation6 + $0x1c] sm:$0xf]
    %v139 = vld [vmem:[#allocation6 + $0x20] sm:$0xf]
    %v140 = vld [vmem:[#allocation6 + $0x24] sm:$0xf]
    %v141 = vld [vmem:[#allocation6 + $0x28] sm:$0xf]
    %v142 = vld [vmem:[#allocation6 + $0x2c] sm:$0xf]
    %v143 = vld [vmem:[#allocation6 + $0x30] sm:$0xf]
    %v144 = vld [vmem:[#allocation6 + $0x34] sm:$0xf]
    %v145 = vld [vmem:[#allocation6 + $0x38] sm:$0xf]
    %v146 = vld [vmem:[#allocation6 + $0x3c] sm:$0xf]
    %v147 = vld [vmem:[#allocation7 + $0x1] sm:$0x1]
    %v148 = vlaneseq
    %v149 = vshrl.u32 %v148, 7
    %v150 = vsub.s32 0, %v149
    %v151 = vrot.slane %v147, %v150
    %v168 = vunpack.c.l.b16 %v131
    %v169 = vunpack.c.l.b16 %v132
    %v170 = vunpack.c.l.b16 %v133
    %v171 = vunpack.c.l.b16 %v134
    %v172 = vunpack.c.l.b16 %v135
    %v173 = vunpack.c.l.b16 %v136
    %v174 = vunpack.c.l.b16 %v137
    %v175 = vunpack.c.l.b16 %v138
    %v176 = vunpack.c.l.b16 %v139
    %v177 = vunpack.c.l.b16 %v140
    %v178 = vunpack.c.l.b16 %v141
    %v179 = vunpack.c.l.b16 %v142
    %v180 = vunpack.c.l.b16 %v143
    %v181 = vunpack.c.l.b16 %v144
    %v182 = vunpack.c.l.b16 %v145
    %v183 = vunpack.c.l.b16 %v146
    %v184 = vpack.c.b16 %v169, %v168
    %v185 = vpack.c.b16 %v171, %v170
    %v186 = vpack.c.b16 %v173, %v172
    %v187 = vpack.c.b16 %v175, %v174
    %v188 = vpack.c.b16 %v177, %v176
    %v189 = vpack.c.b16 %v179, %v178
    %v190 = vpack.c.b16 %v181, %v180
    %v191 = vpack.c.b16 %v183, %v182
    %200 = vmatprep.subr.bf16.mxu0 0
    %201 = vmatpush1.bf16.msra.mxu0 %v191
    %202 = vmatprep.subr.bf16.mxu0 0
    %203 = vmatpush1.bf16.msra.mxu0 %v190
    %204 = vmatprep.subr.bf16.mxu0 0
    %205 = vmatpush1.bf16.msra.mxu0 %v189
    %206 = vmatprep.subr.bf16.mxu0 0
    %207 = vmatpush1.bf16.msra.mxu0 %v188
    %208 = vmatprep.subr.bf16.mxu0 0
    %209 = vmatpush1.bf16.msra.mxu0 %v187
    %210 = vmatprep.subr.bf16.mxu0 0
    %211 = vmatpush1.bf16.msra.mxu0 %v186
    %212 = vmatprep.subr.bf16.mxu0 0
    %213 = vmatpush1.bf16.msra.mxu0 %v185
    %214 = vmatprep.subr.bf16.mxu0 0
    %215 = vmatpush1.bf16.msra.mxu0 %v184
    %216 = vmatprep.subr.bf16.mxu0 0
    %217 = vmatpush2.bf16.msra.mxu0 0
    %218 = vmatprep.subr.bf16.mxu0 0
    %219 = vmatpush2.bf16.msra.mxu0 0
    %220 = vmatprep.subr.bf16.mxu0 0
    %221 = vmatpush2.bf16.msra.mxu0 0
    %222 = vmatprep.subr.bf16.mxu0 0
    %223 = vmatpush2.bf16.msra.mxu0 0
    %224 = vmatprep.subr.bf16.mxu0 0
    %225 = vmatpush2.bf16.msra.mxu0 0
    %226 = vmatprep.subr.bf16.mxu0 0
    %227 = vmatpush2.bf16.msra.mxu0 0
    %228 = vmatprep.subr.bf16.mxu0 0
    %229 = vmatpush2.bf16.msra.mxu0 0
    %230 = vmatprep.subr.bf16.mxu0 0
    %231 = vmatpush2.bf16.msra.mxu0 0
    %232 = vmatprep.mubr.bf16.mxu0 0
    %233 = vmatmul.mubr.bf16.gmra.mxu0 %v130
    %v234 = vpop.f32.mrf.mxu0
    %v235 = vadd.f32 %v151, %v234
    %v236 = vpop.f32.mrf.mxu0
    %v237 = vpop.f32.mrf.mxu0
    %v238 = vpop.f32.mrf.mxu0
    %239 = vdwg.mxu0
    %v240 = vmax.f32 %v235, 0.0
    %v241 = vpack.c.bf16 %v240, %v240
    %s242 = scalar_lea.vmem [#allocation6], 64
    %v243 = vld [vmem:[%s242] sm:$0xf]
    %v244 = vld [vmem:[%s242 + $0x4] sm:$0xf]
    %v245 = vld [vmem:[%s242 + $0x8] sm:$0xf]
    %v246 = vld [vmem:[%s242 + $0xc] sm:$0xf]
    %v247 = vld [vmem:[%s242 + $0x10] sm:$0xf]
    %v248 = vld [vmem:[%s242 + $0x14] sm:$0xf]
    %v249 = vld [vmem:[%s242 + $0x18] sm:$0xf]
    %v250 = vld [vmem:[%s242 + $0x1c] sm:$0xf]
    %v251 = vld [vmem:[%s242 + $0x20] sm:$0xf]
    %v252 = vld [vmem:[%s242 + $0x24] sm:$0xf]
    %v253 = vld [vmem:[%s242 + $0x28] sm:$0xf]
    %v254 = vld [vmem:[%s242 + $0x2c] sm:$0xf]
    %v255 = vld [vmem:[%s242 + $0x30] sm:$0xf]
    %v256 = vld [vmem:[%s242 + $0x34] sm:$0xf]
    %v257 = vld [vmem:[%s242 + $0x38] sm:$0xf]
    %v258 = vld [vmem:[%s242 + $0x3c] sm:$0xf]
    %v259 = vld [vmem:[#allocation7 + $0x2] sm:$0x1]
    %v260 = vlaneseq
    %v261 = vshrl.u32 %v260, 7
    %v262 = vsub.s32 0, %v261
    %v263 = vrot.slane %v259, %v262
    %v280 = vunpack.c.l.b16 %v243
    %v281 = vunpack.c.l.b16 %v244
    %v282 = vunpack.c.l.b16 %v245
    %v283 = vunpack.c.l.b16 %v246
    %v284 = vunpack.c.l.b16 %v247
    %v285 = vunpack.c.l.b16 %v248
    %v286 = vunpack.c.l.b16 %v249
    %v287 = vunpack.c.l.b16 %v250
    %v288 = vunpack.c.l.b16 %v251
    %v289 = vunpack.c.l.b16 %v252
    %v290 = vunpack.c.l.b16 %v253
    %v291 = vunpack.c.l.b16 %v254
    %v292 = vunpack.c.l.b16 %v255
    %v293 = vunpack.c.l.b16 %v256
    %v294 = vunpack.c.l.b16 %v257
    %v295 = vunpack.c.l.b16 %v258
    %v296 = vpack.c.b16 %v281, %v280
    %v297 = vpack.c.b16 %v283, %v282
    %v298 = vpack.c.b16 %v285, %v284
    %v299 = vpack.c.b16 %v287, %v286
    %v300 = vpack.c.b16 %v289, %v288
    %v301 = vpack.c.b16 %v291, %v290
    %v302 = vpack.c.b16 %v293, %v292
    %v303 = vpack.c.b16 %v295, %v294
    %312 = vmatprep.subr.bf16.mxu0 0
    %313 = vmatpush1.bf16.msra.mxu0 %v303
    %314 = vmatprep.subr.bf16.mxu0 0
    %315 = vmatpush1.bf16.msra.mxu0 %v302
    %316 = vmatprep.subr.bf16.mxu0 0
    %317 = vmatpush1.bf16.msra.mxu0 %v301
    %318 = vmatprep.subr.bf16.mxu0 0
    %319 = vmatpush1.bf16.msra.mxu0 %v300
    %320 = vmatprep.subr.bf16.mxu0 0
    %321 = vmatpush1.bf16.msra.mxu0 %v299
    %322 = vmatprep.subr.bf16.mxu0 0
    %323 = vmatpush1.bf16.msra.mxu0 %v298
    %324 = vmatprep.subr.bf16.mxu0 0
    %325 = vmatpush1.bf16.msra.mxu0 %v297
    %326 = vmatprep.subr.bf16.mxu0 0
    %327 = vmatpush1.bf16.msra.mxu0 %v296
    %328 = vmatprep.subr.bf16.mxu0 0
    %329 = vmatpush2.bf16.msra.mxu0 0
    %330 = vmatprep.subr.bf16.mxu0 0
    %331 = vmatpush2.bf16.msra.mxu0 0
    %332 = vmatprep.subr.bf16.mxu0 0
    %333 = vmatpush2.bf16.msra.mxu0 0
    %334 = vmatprep.subr.bf16.mxu0 0
    %335 = vmatpush2.bf16.msra.mxu0 0
    %336 = vmatprep.subr.bf16.mxu0 0
    %337 = vmatpush2.bf16.msra.mxu0 0
    %338 = vmatprep.subr.bf16.mxu0 0
    %339 = vmatpush2.bf16.msra.mxu0 0
    %340 = vmatprep.subr.bf16.mxu0 0
    %341 = vmatpush2.bf16.msra.mxu0 0
    %342 = vmatprep.subr.bf16.mxu0 0
    %343 = vmatpush2.bf16.msra.mxu0 0
    %344 = vmatprep.mubr.bf16.mxu0 0
    %345 = vmatmul.mubr.bf16.gmra.mxu0 %v241
    %v346 = vpop.f32.mrf.mxu0
    %v347 = vadd.f32 %v263, %v346
    %v348 = vpop.f32.mrf.mxu0
    %v349 = vpop.f32.mrf.mxu0
    %v350 = vpop.f32.mrf.mxu0
    %351 = vdwg.mxu0
    %vm352 = vcmask 31744
    %353 = vst.msk [vmem:[%s4] sm:$0xff] %vm352, %v347
    %355 = vrot.lane.b32.xlu0 %v347, 124
    %v356 = vpop.permute.xlu0 %355
    %vm358 = vcmask 7168
    %359 = vst.msk [vmem:[%s5] sm:$0xff] %vm358, %v356
    // Predicated region
    $region34: #{tpu_custom_call.1} parent=1 // pred_check
      _
    $region35: #{tpu_custom_call.1} parent=1 // pred_check_branch
      %361 = sbr.rel (0) target = $region37
    $region36: #{tpu_custom_call.1} parent=1 // pred_region
      _
    $region37: #{tpu_custom_call.1} parent=1 // pred_fallthru
      _
    // Predicated region
    $region38: #{tpu_custom_call.1} parent=1 // pred_check
      _
    $region39: #{tpu_custom_call.1} parent=1 // pred_check_branch
      %363 = sbr.rel (0) target = $region41
    $region40: #{tpu_custom_call.1} parent=1 // pred_region
      _
    $region41: #{tpu_custom_call.1} parent=1 // pred_fallthru
      _
    // Predicated region
    $region42: #{tpu_custom_call.1} parent=1 // pred_check
      _
    $region43: #{tpu_custom_call.1} parent=1 // pred_check_branch
      %365 = sbr.rel (0) target = $region45
    $region44: #{tpu_custom_call.1} parent=1 // pred_region
      _
    $region45: #{tpu_custom_call.1} parent=1 // pred_fallthru
      _
    // Predicated region
    $region46: #{tpu_custom_call.1} parent=1 // pred_check
      _
    $region47: #{tpu_custom_call.1} parent=1 // pred_check_branch
      %367 = sbr.rel (0) target = $region49
    $region48: #{tpu_custom_call.1} parent=1 // pred_region
      _
    $region49: #{tpu_custom_call.1} parent=1 // pred_fallthru
      _
    %368 = vsyncpa [#allocation3], 1
    %369 = vsyncpa [#allocation5], 1
    %370 = vsyncpa [#allocation8], 1

</llo_original>
